<compile_context>
chip_gen: v7x
topology: tpu7x:2x2x1
jax: 0.10.0
libtpu: 0.0.40
codegen_flags: <defaults>
</compile_context>

<pallas_src>
import math

import jax
import jax.numpy as jnp
from jax.experimental import pallas as pl
from jax.experimental.pallas import tpu as pltpu


# -----------------------------------------------------------------------------
# Kernel 1: fused "CNN feature extractor" + fc1 + LSTM input projection.
#   patches (tile_rows, Kp) @ conv_w (Kp, 128) -> ReLU -> sum-pool over P (XLU)
#   -> fc1 (1/P folded into weights) -> @ W_ih + (b_ih + b_hh) -> (tn, 4H=128).
# All matmul outputs are 128 lanes wide (zero-padded channels) => no masked stores.
# -----------------------------------------------------------------------------
def _feat_gates_kernel(p_ref, cw_ref, cb_ref, w1_ref, b1_ref, wih_ref, bl_ref, o_ref):
    wdt = cw_ref.dtype                                       # f32 or bf16 MXU operands
    acts = jnp.dot(p_ref[...], cw_ref[...], preferred_element_type=jnp.float32)
    acts = jnp.maximum(acts + cb_ref[...], 0.0)              # conv + ReLU, (tile_rows, 128)
    tn = o_ref.shape[0]
    rows, cc = acts.shape
    p = rows // tn
    # Global average pool: the 1/P scale is folded into w1 on the host -> plain sum here.
    feats = jnp.sum(acts.reshape(tn, p, cc), axis=1)         # (tn, 128)
    f1 = jnp.dot(feats.astype(wdt), w1_ref[...],
                 preferred_element_type=jnp.float32) + b1_ref[...]
    o_ref[...] = (jnp.dot(f1.astype(wdt), wih_ref[...],
                          preferred_element_type=jnp.float32)
                  + bl_ref[...])                             # LSTM input projection (tn, 4H)


def _pick_tile_images(n, p, max_rows=2048):
    """Largest whole-image tile with <= max_rows im2col rows per grid step.
    Hard constraint: tn % 8 == 0 or tn == n (sublane legality of the (tn, 128) output block).
    Preference: even grid length so v7x's two TensorCores both get work ("parallel" axis)."""
    cap = max(8, max_rows // max(p, 1))
    if n <= 8:
        return n
    aligned = None
    for tn in range(min(n, cap), 0, -1):
        if n % tn:
            continue
        if tn % 8 == 0:
            if (n // tn) % 2 == 0:
                return tn                                    # sublane-aligned + even grid
            if aligned is None:
                aligned = tn                                 # sublane-aligned fallback
    return aligned if aligned is not None else n


def feature_gates(patches2d, p_per_img, conv_w_t, conv_b, fc1_w_t, fc1_b, wih_t, lstm_b):
    NP, Kp = patches2d.shape
    N = NP // p_per_img
    G4 = wih_t.shape[1]
    tn = _pick_tile_images(N, p_per_img)
    tile_rows = tn * p_per_img
    # NOTE: weight/bias blocks use constant index maps; Pallas keeps a block resident (no
    # re-DMA) while its block index is unchanged between consecutive grid steps.
    return pl.pallas_call(
        _feat_gates_kernel,
        out_shape=jax.ShapeDtypeStruct((N, G4), jnp.float32),
        grid=(N // tn,),
        in_specs=[
            pl.BlockSpec((tile_rows, Kp), lambda i: (i, 0)),
            pl.BlockSpec(conv_w_t.shape, lambda i: (0, 0)),
            pl.BlockSpec(conv_b.shape, lambda i: (0, 0)),
            pl.BlockSpec(fc1_w_t.shape, lambda i: (0, 0)),
            pl.BlockSpec(fc1_b.shape, lambda i: (0, 0)),
            pl.BlockSpec(wih_t.shape, lambda i: (0, 0)),
            pl.BlockSpec(lstm_b.shape, lambda i: (0, 0)),
        ],
        out_specs=pl.BlockSpec((tn, G4), lambda i: (i, 0)),
        compiler_params=pltpu.CompilerParams(dimension_semantics=("parallel",)),
    )(patches2d, conv_w_t, conv_b, fc1_w_t, fc1_b, wih_t, lstm_b)


# -----------------------------------------------------------------------------
# Kernel 2: LSTM recurrence (PyTorch gate order i, f, g, o), tiled over time with the
# (h, c) carry in VMEM scratch, fused with the fc2 + softmax head at the last step.
# Per step: one small h @ W_hh matmul + ONE full-width 128-lane tanh on the EUP
# (sigmoid(x) = 0.5*tanh(0.5*x) + 0.5 recovered with a per-lane scale/shift).
# -----------------------------------------------------------------------------
def _lstm_head_kernel(xg_ref, whh_ref, w2_ref, b2_ref, y_ref, h_ref, h_sc, c_sc):
    Tc, Bp, G4 = xg_ref.shape
    Hh = whh_ref.shape[0]
    step_idx = pl.program_id(0)

    @pl.when(step_idx == 0)
    def _():
        h_sc[...] = jnp.zeros_like(h_sc)
        c_sc[...] = jnp.zeros_like(c_sc)

    whh = whh_ref[...]
    # Per-lane scale/shift (hoisted out of the loop): 0.5/0.5 for i,f,o lanes, 1.0/0.0 for g.
    lane = jax.lax.broadcasted_iota(jnp.int32, (1, G4), 1)
    is_g = jnp.logical_and(lane >= 2 * Hh, lane < 3 * Hh)
    scale = jnp.where(is_g, 1.0, 0.5)
    shift = jnp.where(is_g, 0.0, 0.5)

    def step(t, carry):
        h, c = carry
        gates = xg_ref[t] + jnp.dot(h, whh, preferred_element_type=jnp.float32)
        fused = jnp.tanh(gates * scale) * scale + shift      # sigmoid(i,f,o) / tanh(g)
        i_g = fused[:, 0 * Hh:1 * Hh]
        f_g = fused[:, 1 * Hh:2 * Hh]
        g_g = fused[:, 2 * Hh:3 * Hh]
        o_g = fused[:, 3 * Hh:4 * Hh]
        c_new = f_g * c + i_g * g_g
        h_new = o_g * jnp.tanh(c_new)
        return (h_new, c_new)

    # Unroll bounded by the time-chunk size (<= 32): keeps LLO scheduling visibility
    # without blowing up instruction memory / vreg live ranges at large T.
    h_last, c_last = jax.lax.fori_loop(0, Tc, step, (h_sc[...], c_sc[...]), unroll=True)
    h_sc[...] = h_last
    c_sc[...] = c_last

    @pl.when(step_idx == pl.num_programs(0) - 1)
    def _():
        logits = (jnp.dot(h_last, w2_ref[...], preferred_element_type=jnp.float32)
                  + b2_ref[...])
        m = jnp.max(logits, axis=-1, keepdims=True)
        e = jnp.exp(logits - m)
        y_ref[...] = e / jnp.sum(e, axis=-1, keepdims=True)
        h_ref[...] = h_last


def _pick_time_chunk(t, max_chunk=32):
    if t <= max_chunk:
        return t
    for c in range(max_chunk, 0, -1):
        if t % c == 0:
            return c
    return 1


def lstm_head(xg_tbg, whh_t, fc2_w_t, fc2_b, hidden):
    T, Bp, G4 = xg_tbg.shape
    O = fc2_w_t.shape[1]
    tc = _pick_time_chunk(T)
    return pl.pallas_call(
        _lstm_head_kernel,
        out_shape=(jax.ShapeDtypeStruct((Bp, O), jnp.float32),
                   jax.ShapeDtypeStruct((Bp, hidden), jnp.float32)),
        grid=(T // tc,),
        in_specs=[
            pl.BlockSpec((tc, Bp, G4), lambda i: (i, 0, 0)),
            pl.BlockSpec(whh_t.shape, lambda i: (0, 0)),
            pl.BlockSpec(fc2_w_t.shape, lambda i: (0, 0)),
            pl.BlockSpec(fc2_b.shape, lambda i: (0, 0)),
        ],
        out_specs=(pl.BlockSpec((Bp, O), lambda i: (0, 0)),
                   pl.BlockSpec((Bp, hidden), lambda i: (0, 0))),
        scratch_shapes=[pltpu.VMEM((Bp, hidden), jnp.float32),
                        pltpu.VMEM((Bp, hidden), jnp.float32)],
        compiler_params=pltpu.CompilerParams(dimension_semantics=("arbitrary",)),
    )(xg_tbg, whh_t, fc2_w_t, fc2_b)


# -----------------------------------------------------------------------------
# Glue (plain JAX): im2col patch extraction, time-major reorder, parameter setup.
# -----------------------------------------------------------------------------
def im2col(x, k=3, stride=2, pad=1):
    # x: (N, C, H, W) NCHW -> patches (N, Ho*Wo, C*k*k), feature order (C, kh, kw)
    N, C, H, W = x.shape
    xp = jnp.pad(x, ((0, 0), (0, 0), (pad, pad), (pad, pad)))
    Ho = (H + 2 * pad - k) // stride + 1
    Wo = (W + 2 * pad - k) // stride + 1
    cols = []
    for kh in range(k):
        for kw in range(k):
            cols.append(xp[:, :, kh:kh + stride * Ho:stride, kw:kw + stride * Wo:stride])
    patches = jnp.stack(cols, axis=1)                       # (N, k*k, C, Ho, Wo)
    patches = patches.reshape(N, k, k, C, Ho, Wo)
    patches = patches.transpose(0, 4, 5, 3, 1, 2)           # (N, Ho, Wo, C, kh, kw)
    return patches.reshape(N, Ho * Wo, C * k * k)


def _prep_patches(imgs, k_padded, dtype=jnp.float32):
    B, n_frame, face, C, H, W = imgs.shape
    T = n_frame * face
    # Time-major (t, b) image ordering up-front: kernel-1's output reshapes directly to
    # (T, B, 4H) with no inter-kernel transpose / extra HBM pass.
    x = imgs.reshape(B, T, C, H, W).transpose(1, 0, 2, 3, 4).reshape(T * B, C, H, W)
    patches = im2col(x)                                     # (N, P, K), N = T*B
    N, P, K = patches.shape
    patches2d = patches.reshape(N * P, K)
    if k_padded > K:                                        # pad contraction dim 27 -> 32
        patches2d = jnp.pad(patches2d, ((0, 0), (0, k_padded - K)))
    return patches2d.astype(dtype), N, P, T, B


def init_params(key, C=3, k=3, conv_ch=32, fc1_hidden=64, lstm_hidden=32, out_size=1,
                lane_pad=128):
    ks = jax.random.split(key, 8)
    u = lambda kk, shape, a: jax.random.uniform(kk, shape, jnp.float32, -a, a)
    K = C * k * k
    Kp = ((K + 7) // 8) * 8                                 # sublane-aligned contraction dim
    cc_p = max(conv_ch, lane_pad)                           # lane-dense conv channels
    f1_p = max(fc1_hidden, lane_pad)                        # lane-dense fc1 width
    conv_w = u(ks[0], (conv_ch, K), 0.1)                    # (out, C*kh*kw) PyTorch flatten
    conv_w_t = jnp.zeros((Kp, cc_p), jnp.float32).at[:K, :conv_ch].set(conv_w.T)
    conv_b = jnp.zeros((1, cc_p), jnp.float32)
    fc1_w = u(ks[1], (fc1_hidden, conv_ch), 0.1)            # nn.Linear init_weights: U(-0.1, 0.1)
    fc1_w_t = jnp.zeros((cc_p, f1_p), jnp.float32).at[:conv_ch, :fc1_hidden].set(fc1_w.T)
    fc1_b = jnp.zeros((1, f1_p), jnp.float32)
    s = 1.0 / math.sqrt(lstm_hidden)                        # PyTorch LSTM default init
    w_ih = u(ks[2], (4 * lstm_hidden, fc1_hidden), s)
    wih_t = jnp.zeros((f1_p, 4 * lstm_hidden), jnp.float32).at[:fc1_hidden, :].set(w_ih.T)
    w_hh = u(ks[3], (4 * lstm_hidden, lstm_hidden), s)
    b_ih = u(ks[4], (4 * lstm_hidden,), s)
    b_hh = u(ks[5], (4 * lstm_hidden,), s)
    fc2_w = u(ks[6], (out_size, lstm_hidden), 0.1)
    fc2_b = jnp.zeros((1, out_size), jnp.float32)
    return dict(
        conv_w_t=conv_w_t, conv_b=conv_b, k_padded=Kp,
        fc1_w_t=fc1_w_t, fc1_b=fc1_b,
        wih_t=wih_t, whh_t=w_hh.T, lstm_b=(b_ih + b_hh)[None, :],
        fc2_w_t=fc2_w.T, fc2_b=fc2_b,
        lstm_hidden=lstm_hidden,
    )


def cnn_lstm2_forward(params, imgs, mxu_dtype=jnp.float32):
    """mxu_dtype=jnp.bfloat16 casts kernel-1's MXU operands (patches + weights) while keeping
    f32 accumulation and all elementwise / recurrent math in f32 (v6e/v7x MXUs are bf16-native;
    v5e's VPU/EUP have no bf16, so non-matmul math stays f32 on every generation)."""
    patches2d, N, P, T, B = _prep_patches(imgs, params["k_padded"], mxu_dtype)
    conv_w = params["conv_w_t"].astype(mxu_dtype)
    fc1_w = (params["fc1_w_t"] * (1.0 / P)).astype(mxu_dtype)   # fold 1/P pool scale into fc1
    wih = params["wih_t"].astype(mxu_dtype)
    xg = feature_gates(patches2d, P, conv_w, params["conv_b"],
                       fc1_w, params["fc1_b"], wih, params["lstm_b"])  # (T*B, 4H), time-major
    G4 = xg.shape[-1]
    xg3 = xg.reshape(T, B, G4)
    Bp = ((B + 7) // 8) * 8                 # pad batch to 8 sublanes for the serial recurrence
    if Bp != B:
        xg3 = jnp.pad(xg3, ((0, 0), (0, Bp - B), (0, 0)))
    y, h_last = lstm_head(xg3, params["whh_t"], params["fc2_w_t"], params["fc2_b"],
                          hidden=params["lstm_hidden"])
    return y[:B], h_last[:B]


# Pure-JAX reference (same math, standard LSTM formulation) for correctness checking.
def reference_forward(params, imgs):
    with jax.default_matmul_precision("highest"):
        patches2d, N, P, T, B = _prep_patches(imgs, params["k_padded"])
        acts = jnp.maximum(patches2d @ params["conv_w_t"] + params["conv_b"], 0.0)
        feats = acts.reshape(N, P, -1).mean(axis=1)
        f1 = feats @ params["fc1_w_t"] + params["fc1_b"]
        seq = (f1 @ params["wih_t"] + params["lstm_b"]).reshape(T, B, -1)   # time-major gates
        Hh = params["lstm_hidden"]

        def step(carry, g_t):
            h, c = carry
            gates = g_t + h @ params["whh_t"]
            i = jax.nn.sigmoid(gates[:, :Hh])
            f = jax.nn.sigmoid(gates[:, Hh:2 * Hh])
            g = jnp.tanh(gates[:, 2 * Hh:3 * Hh])
            o = jax.nn.sigmoid(gates[:, 3 * Hh:])
            c = f * c + i * g
            h = o * jnp.tanh(c)
            return (h, c), None

        h0 = jnp.zeros((B, Hh), jnp.float32)
        c0 = jnp.zeros((B, Hh), jnp.float32)
        (h_last, _), _ = jax.lax.scan(step, (h0, c0), seq)
        logits = h_last @ params["fc2_w_t"] + params["fc2_b"]
        return jax.nn.softmax(logits, axis=-1), h_last


if __name__ == "__main__":
    key = jax.random.PRNGKey(0)
    k_param, k_img = jax.random.split(key)

    # imgs: Batch:Frames:face:C:H:W  (small synthetic shapes)
    B, n_frame, face, C, H, W = 2, 4, 2, 3, 16, 16
    imgs = jax.random.normal(k_img, (B, n_frame, face, C, H, W), dtype=jnp.float32)

    params = init_params(k_param)

    # f32 MXU operands: strict check against the pure-JAX reference.
    y, h_last = cnn_lstm2_forward(params, imgs)
    y = jax.block_until_ready(y)
    h_last = jax.block_until_ready(h_last)

    y_ref, h_ref = reference_forward(params, imgs)
    assert y.shape == (B, 1), y.shape
    assert jnp.allclose(h_last, h_ref, atol=1e-3, rtol=1e-3), "LSTM hidden mismatch"
    assert jnp.allclose(y, y_ref, atol=1e-4), "final softmax output mismatch"

    # bf16 MXU operands (f32 accumulation): bounded drift vs the f32 reference.
    y16, h16 = cnn_lstm2_forward(params, imgs, mxu_dtype=jnp.bfloat16)
    y16 = jax.block_until_ready(y16)
    h16 = jax.block_until_ready(h16)
    assert y16.shape == (B, 1), y16.shape
    assert bool(jnp.all(jnp.isfinite(h16))), "bf16 path produced non-finite values"
    assert jnp.allclose(h16, h_ref, atol=5e-2, rtol=5e-2), "bf16 LSTM hidden drift too large"

    print("KERNEL_OK")
</pallas_src>

<mosaic_0001>
module attributes {stable_mosaic.version = 11 : i64} {
  func.func @_feat_gates_kernel(%arg0: i32, %arg1: memref<512x32xf32, #tpu.memory_space<vmem>>, %arg2: memref<32x128xf32, #tpu.memory_space<vmem>>, %arg3: memref<1x128xf32, #tpu.memory_space<vmem>>, %arg4: memref<128x128xf32, #tpu.memory_space<vmem>>, %arg5: memref<1x128xf32, #tpu.memory_space<vmem>>, %arg6: memref<128x128xf32, #tpu.memory_space<vmem>>, %arg7: memref<1x128xf32, #tpu.memory_space<vmem>>, %arg8: memref<8x128xf32, #tpu.memory_space<vmem>>) attributes {dimension_semantics = [#tpu.dimension_semantics<parallel>], iteration_bounds = array<i64: 2>, scalar_prefetch = 0 : i64, scratch_operands = 0 : i64, tpu.core_type = #tpu.core_type<tc>, window_params = [{transform_indices = @transform_0, window_bounds = array<i64: 512, 32>}, {pipeline_mode = #tpu.pipeline_mode<synchronous>, transform_indices = @transform_1, window_bounds = array<i64: 32, 128>}, {pipeline_mode = #tpu.pipeline_mode<synchronous>, transform_indices = @transform_2, window_bounds = array<i64: 1, 128>}, {pipeline_mode = #tpu.pipeline_mode<synchronous>, transform_indices = @transform_3, window_bounds = array<i64: 128, 128>}, {pipeline_mode = #tpu.pipeline_mode<synchronous>, transform_indices = @transform_4, window_bounds = array<i64: 1, 128>}, {pipeline_mode = #tpu.pipeline_mode<synchronous>, transform_indices = @transform_5, window_bounds = array<i64: 128, 128>}, {pipeline_mode = #tpu.pipeline_mode<synchronous>, transform_indices = @transform_6, window_bounds = array<i64: 1, 128>}, {transform_indices = @transform_7, window_bounds = array<i64: 8, 128>}]} {
    %c0 = arith.constant 0 : index
    %c0_0 = arith.constant 0 : index
    %0 = vector.load %arg1[%c0, %c0_0] : memref<512x32xf32, #tpu.memory_space<vmem>>, vector<512x32xf32>
    %c0_1 = arith.constant 0 : index
    %c0_2 = arith.constant 0 : index
    %1 = vector.load %arg2[%c0_1, %c0_2] : memref<32x128xf32, #tpu.memory_space<vmem>>, vector<32x128xf32>
    %cst = arith.constant dense<0.000000e+00> : vector<512x128xf32>
    %2 = tpu.matmul %0, %1, %cst {dimension_numbers = #tpu.dot_dimension_numbers<[1], [0], [0], [1], [0, 0, 1, 1], [], []>} : vector<512x32xf32>, vector<32x128xf32>, vector<512x128xf32> -> vector<512x128xf32>
    %c0_3 = arith.constant 0 : index
    %c0_4 = arith.constant 0 : index
    %3 = vector.load %arg3[%c0_3, %c0_4] : memref<1x128xf32, #tpu.memory_space<vmem>>, vector<1x128xf32>
    %4 = vector.broadcast %3 : vector<1x128xf32> to vector<512x128xf32>
    %5 = arith.addf %2, %4 : vector<512x128xf32>
    %cst_5 = arith.constant 0.000000e+00 : f32
    %6 = vector.broadcast %cst_5 : f32 to vector<512x128xf32>
    %7 = arith.maximumf %5, %6 : vector<512x128xf32>
    %8 = vector.shape_cast %7 : vector<512x128xf32> to vector<8x64x128xf32>
    %cst_6 = arith.constant dense<0.000000e+00> : vector<8x128xf32>
    %9 = vector.multi_reduction <add>, %8, %cst_6 [1] : vector<8x64x128xf32> to vector<8x128xf32>
    %c0_7 = arith.constant 0 : index
    %c0_8 = arith.constant 0 : index
    %10 = vector.load %arg4[%c0_7, %c0_8] : memref<128x128xf32, #tpu.memory_space<vmem>>, vector<128x128xf32>
    %cst_9 = arith.constant dense<0.000000e+00> : vector<8x128xf32>
    %11 = tpu.matmul %9, %10, %cst_9 {dimension_numbers = #tpu.dot_dimension_numbers<[1], [0], [0], [1], [0, 0, 1, 1], [], []>} : vector<8x128xf32>, vector<128x128xf32>, vector<8x128xf32> -> vector<8x128xf32>
    %c0_10 = arith.constant 0 : index
    %c0_11 = arith.constant 0 : index
    %12 = vector.load %arg5[%c0_10, %c0_11] : memref<1x128xf32, #tpu.memory_space<vmem>>, vector<1x128xf32>
    %13 = vector.broadcast %12 : vector<1x128xf32> to vector<8x128xf32>
    %14 = arith.addf %11, %13 : vector<8x128xf32>
    %c0_12 = arith.constant 0 : index
    %c0_13 = arith.constant 0 : index
    %15 = vector.load %arg6[%c0_12, %c0_13] : memref<128x128xf32, #tpu.memory_space<vmem>>, vector<128x128xf32>
    %cst_14 = arith.constant dense<0.000000e+00> : vector<8x128xf32>
    %16 = tpu.matmul %14, %15, %cst_14 {dimension_numbers = #tpu.dot_dimension_numbers<[1], [0], [0], [1], [0, 0, 1, 1], [], []>} : vector<8x128xf32>, vector<128x128xf32>, vector<8x128xf32> -> vector<8x128xf32>
    %c0_15 = arith.constant 0 : index
    %c0_16 = arith.constant 0 : index
    %17 = vector.load %arg7[%c0_15, %c0_16] : memref<1x128xf32, #tpu.memory_space<vmem>>, vector<1x128xf32>
    %18 = vector.broadcast %17 : vector<1x128xf32> to vector<8x128xf32>
    %19 = arith.addf %16, %18 : vector<8x128xf32>
    %c0_17 = arith.constant 0 : index
    %c0_18 = arith.constant 0 : index
    %20 = vector.load %arg8[%c0_17, %c0_18] : memref<8x128xf32, #tpu.memory_space<vmem>>, vector<8x128xf32>
    tpu.vector_store %arg8[%c0_17, %c0_18], %19 {strides = array<i32>} : memref<8x128xf32, #tpu.memory_space<vmem>>, vector<8x128xf32>,
    return
  }
  func.func @transform_0(%arg0: i32) -> (i32, i32) {
    %c0_i32 = arith.constant 0 : i32
    %c0_i32_0 = arith.constant 0 : i32
    return %arg0, %c0_i32 : i32, i32
  }
  func.func @transform_1(%arg0: i32) -> (i32, i32) {
    %c0_i32 = arith.constant 0 : i32
    %c0_i32_0 = arith.constant 0 : i32
    %c0_i32_1 = arith.constant 0 : i32
    return %c0_i32, %c0_i32_0 : i32, i32
  }
  func.func @transform_2(%arg0: i32) -> (i32, i32) {
    %c0_i32 = arith.constant 0 : i32
    %c0_i32_0 = arith.constant 0 : i32
    %c0_i32_1 = arith.constant 0 : i32
    return %c0_i32, %c0_i32_0 : i32, i32
  }
  func.func @transform_3(%arg0: i32) -> (i32, i32) {
    %c0_i32 = arith.constant 0 : i32
    %c0_i32_0 = arith.constant 0 : i32
    %c0_i32_1 = arith.constant 0 : i32
    return %c0_i32, %c0_i32_0 : i32, i32
  }
  func.func @transform_4(%arg0: i32) -> (i32, i32) {
    %c0_i32 = arith.constant 0 : i32
    %c0_i32_0 = arith.constant 0 : i32
    %c0_i32_1 = arith.constant 0 : i32
    return %c0_i32, %c0_i32_0 : i32, i32
  }
  func.func @transform_5(%arg0: i32) -> (i32, i32) {
    %c0_i32 = arith.constant 0 : i32
    %c0_i32_0 = arith.constant 0 : i32
    %c0_i32_1 = arith.constant 0 : i32
    return %c0_i32, %c0_i32_0 : i32, i32
  }
  func.func @transform_6(%arg0: i32) -> (i32, i32) {
    %c0_i32 = arith.constant 0 : i32
    %c0_i32_0 = arith.constant 0 : i32
    %c0_i32_1 = arith.constant 0 : i32
    return %c0_i32, %c0_i32_0 : i32, i32
  }
  func.func @transform_7(%arg0: i32) -> (i32, i32) {
    %c0_i32 = arith.constant 0 : i32
    %c0_i32_0 = arith.constant 0 : i32
    return %arg0, %c0_i32 : i32, i32
  }
}

</mosaic_0001>

<llo_original>
// kernel: tpu_custom_call.1
$region0: #{tpu_custom_call.1}
  #allocation0 [shape = 'u32[]', space=smem, size = 0x4, offset = 0x4, fixed_abs, tag = 'smem constant byte address 0x4 - core index']
  #allocation1 [shape = 'u32[144,128]{1,0:T(1,128)}', space=vmem, size = 0x12000, scoped, tag = 'internal scratch']
  %s0 = inlined_call_operand.vmem [shape: f32[1024,32], index: 0, kind: input, shape index: {}]
  %s1 = inlined_call_operand.vmem [shape: f32[32,128], index: 1, kind: input, shape index: {}]
  %s2 = inlined_call_operand.vmem [shape: f32[1,128], index: 2, kind: input, shape index: {}]
  %s3 = inlined_call_operand.vmem [shape: f32[128,128], index: 3, kind: input, shape index: {}]
  %s4 = inlined_call_operand.vmem [shape: f32[1,128], index: 4, kind: input, shape index: {}]
  %s5 = inlined_call_operand.vmem [shape: f32[128,128], index: 5, kind: input, shape index: {}]
  %s6 = inlined_call_operand.vmem [shape: f32[1,128], index: 6, kind: input, shape index: {}]
  %s7 = inlined_call_operand.hbm [shape: f32[16,128], index: 7, kind: output, shape index: {}]
  %s8 = sld [smem:[#allocation0]]
  $region61: #{tpu_custom_call.1} parent=0
    _
  %s10 = ssub.s32 1, %s8
  %s11 = scalar_select 0, %s10, %s8
  $region1: #{tpu_custom_call.1} parent=0
    #allocation2 [shape = 'u8[8192]{0}', space=vmem, size = 0x2000, scoped, tag = 'output window, operand 0']
    #allocation3 [shape = 's32[2]{0}', space=sflag, size = 0x8, scoped, tag = 'scoped memory for tpu_custom_call.1']
    %12 = vsyncpa [#allocation3], 0
    %s13 = scalar_lea.sflag [#allocation3], 1
    %14 = vsyncpa %s13, 0
    loop: start=0, step=1, limit=4
    $region2: #{tpu_custom_call.1} parent=1 // loop_pre_header
      _
    $region3: #{tpu_custom_call.1} parent=1 // loop_header
      %s16 = sphi 0, %s20
      %p17 = scmp.ge.s32.totalorder %s16, 4
      %s26 = sphi 0, %s28
      %s29 = sphi 0, %s26
      %s30 = sphi 0, %s29
      %s46 = sphi 0, %s30
      %s50 = sphi 0, %s50
      %s52 = sphi 0, %s50
      %s53 = sphi 0, %s52
      %s67 = sphi 0, %s53
      %s71 = sphi 0, %s71
      %s73 = sphi 0, %s71
      %s74 = sphi 0, %s73
      %s88 = sphi 0, %s74
      %s92 = sphi 0, %s92
      %s94 = sphi 0, %s92
      %s95 = sphi 0, %s94
      %s109 = sphi 0, %s95
      %s113 = sphi 0, %s113
      %s115 = sphi 0, %s113
      %s116 = sphi 0, %s115
      %s130 = sphi 0, %s116
      %s134 = sphi 0, %s134
      %s136 = sphi 0, %s134
      %s137 = sphi 0, %s136
      %s151 = sphi 0, %s137
      %s155 = sphi 0, %s155
      %s157 = sphi 0, %s155
      %s158 = sphi 0, %s157
      %s172 = sphi 0, %s158
      %s178 = sphi 0, %s180
      %s181 = sphi 0, %s178
      %s182 = sphi 0, %s181
      %s198 = sphi 0, %s182
    $region4: #{tpu_custom_call.1} parent=1 // loop_header_branch
      %19 = sbr.rel (%p17) target = $region8
    $region5: #{tpu_custom_call.1} parent=1 // loop_body
      %s21 = ssub.s32 %s16, 1
      %s22 = ssub.s32 %s16, 2
      %s23 = sadd.s32 %s16, 1
      %s24 = ssub.s32 %s16, %s23
      %p25 = scmp.eq.s32.totalorder %s24, 0
      %s27 = sadd.s32 %s26, 1
      %s28 = scalar_select %p25, %s26, %s27
      %p31 = pneg %p25
      %p32 = scmp.eq.s32.totalorder %s16, 1
      %p33 = por %p31, %p32
      %p34 = scmp.ne.s32.totalorder %s26, %s29
      %p35 = scmp.eq.s32.totalorder %s16, 0
      %p36 = por %p34, %p35
      %p37 = scmp.ne.s32.totalorder %s26, %s29
      %p38 = scmp.eq.s32.totalorder %s21, 1
      %p39 = por %p37, %p38
      %p40 = scmp.ne.s32.totalorder %s29, %s30
      %p41 = scmp.eq.s32.totalorder %s21, 0
      %p42 = por %p40, %p41
      %p43 = scmp.ne.s32.totalorder %s29, %s30
      %p44 = scmp.eq.s32.totalorder %s22, 1
      %p45 = por %p43, %p44
      %p47 = scmp.ne.s32.totalorder %s30, %s46
      %p48 = scmp.eq.s32.totalorder %s22, 0
      %p49 = por %p47, %p48
      %s51 = sadd.s32 %s50, 1
      %p54 = scmp.eq.s32.totalorder %s16, 1
      %p55 = scmp.ne.s32.totalorder %s50, %s52
      %p56 = scmp.eq.s32.totalorder %s16, 0
      %p57 = por %p55, %p56
      %p58 = scmp.ne.s32.totalorder %s50, %s52
      %p59 = scmp.eq.s32.totalorder %s21, 1
      %p60 = por %p58, %p59
      %p61 = scmp.ne.s32.totalorder %s52, %s53
      %p62 = scmp.eq.s32.totalorder %s21, 0
      %p63 = por %p61, %p62
      %p64 = scmp.ne.s32.totalorder %s52, %s53
      %p65 = scmp.eq.s32.totalorder %s22, 1
      %p66 = por %p64, %p65
      %p68 = scmp.ne.s32.totalorder %s53, %s67
      %p69 = scmp.eq.s32.totalorder %s22, 0
      %p70 = por %p68, %p69
      %s72 = sadd.s32 %s71, 1
      %p75 = scmp.eq.s32.totalorder %s16, 1
      %p76 = scmp.ne.s32.totalorder %s71, %s73
      %p77 = scmp.eq.s32.totalorder %s16, 0
      %p78 = por %p76, %p77
      %p79 = scmp.ne.s32.totalorder %s71, %s73
      %p80 = scmp.eq.s32.totalorder %s21, 1
      %p81 = por %p79, %p80
      %p82 = scmp.ne.s32.totalorder %s73, %s74
      %p83 = scmp.eq.s32.totalorder %s21, 0
      %p84 = por %p82, %p83
      %p85 = scmp.ne.s32.totalorder %s73, %s74
      %p86 = scmp.eq.s32.totalorder %s22, 1
      %p87 = por %p85, %p86
      %p89 = scmp.ne.s32.totalorder %s74, %s88
      %p90 = scmp.eq.s32.totalorder %s22, 0
      %p91 = por %p89, %p90
      %s93 = sadd.s32 %s92, 1
      %p96 = scmp.eq.s32.totalorder %s16, 1
      %p97 = scmp.ne.s32.totalorder %s92, %s94
      %p98 = scmp.eq.s32.totalorder %s16, 0
      %p99 = por %p97, %p98
      %p100 = scmp.ne.s32.totalorder %s92, %s94
      %p101 = scmp.eq.s32.totalorder %s21, 1
      %p102 = por %p100, %p101
      %p103 = scmp.ne.s32.totalorder %s94, %s95
      %p104 = scmp.eq.s32.totalorder %s21, 0
      %p105 = por %p103, %p104
      %p106 = scmp.ne.s32.totalorder %s94, %s95
      %p107 = scmp.eq.s32.totalorder %s22, 1
      %p108 = por %p106, %p107
      %p110 = scmp.ne.s32.totalorder %s95, %s109
      %p111 = scmp.eq.s32.totalorder %s22, 0
      %p112 = por %p110, %p111
      %s114 = sadd.s32 %s113, 1
      %p117 = scmp.eq.s32.totalorder %s16, 1
      %p118 = scmp.ne.s32.totalorder %s113, %s115
      %p119 = scmp.eq.s32.totalorder %s16, 0
      %p120 = por %p118, %p119
      %p121 = scmp.ne.s32.totalorder %s113, %s115
      %p122 = scmp.eq.s32.totalorder %s21, 1
      %p123 = por %p121, %p122
      %p124 = scmp.ne.s32.totalorder %s115, %s116
      %p125 = scmp.eq.s32.totalorder %s21, 0
      %p126 = por %p124, %p125
      %p127 = scmp.ne.s32.totalorder %s115, %s116
      %p128 = scmp.eq.s32.totalorder %s22, 1
      %p129 = por %p127, %p128
      %p131 = scmp.ne.s32.totalorder %s116, %s130
      %p132 = scmp.eq.s32.totalorder %s22, 0
      %p133 = por %p131, %p132
      %s135 = sadd.s32 %s134, 1
      %p138 = scmp.eq.s32.totalorder %s16, 1
      %p139 = scmp.ne.s32.totalorder %s134, %s136
      %p140 = scmp.eq.s32.totalorder %s16, 0
      %p141 = por %p139, %p140
      %p142 = scmp.ne.s32.totalorder %s134, %s136
      %p143 = scmp.eq.s32.totalorder %s21, 1
      %p144 = por %p142, %p143
      %p145 = scmp.ne.s32.totalorder %s136, %s137
      %p146 = scmp.eq.s32.totalorder %s21, 0
      %p147 = por %p145, %p146
      %p148 = scmp.ne.s32.totalorder %s136, %s137
      %p149 = scmp.eq.s32.totalorder %s22, 1
      %p150 = por %p148, %p149
      %p152 = scmp.ne.s32.totalorder %s137, %s151
      %p153 = scmp.eq.s32.totalorder %s22, 0
      %p154 = por %p152, %p153
      %s156 = sadd.s32 %s155, 1
      %p159 = scmp.eq.s32.totalorder %s16, 1
      %p160 = scmp.ne.s32.totalorder %s155, %s157
      %p161 = scmp.eq.s32.totalorder %s16, 0
      %p162 = por %p160, %p161
      %p163 = scmp.ne.s32.totalorder %s155, %s157
      %p164 = scmp.eq.s32.totalorder %s21, 1
      %p165 = por %p163, %p164
      %p166 = scmp.ne.s32.totalorder %s157, %s158
      %p167 = scmp.eq.s32.totalorder %s21, 0
      %p168 = por %p166, %p167
      %p169 = scmp.ne.s32.totalorder %s157, %s158
      %p170 = scmp.eq.s32.totalorder %s22, 1
      %p171 = por %p169, %p170
      %p173 = scmp.ne.s32.totalorder %s158, %s172
      %p174 = scmp.eq.s32.totalorder %s22, 0
      %p175 = por %p173, %p174
      %s176 = ssub.s32 %s16, %s23
      %p177 = scmp.eq.s32.totalorder %s176, 0
      %s179 = sadd.s32 %s178, 1
      %s180 = scalar_select %p177, %s178, %s179
      %p183 = pneg %p177
      %p184 = scmp.eq.s32.totalorder %s16, 1
      %p185 = por %p183, %p184
      %p186 = scmp.ne.s32.totalorder %s178, %s181
      %p187 = scmp.eq.s32.totalorder %s16, 0
      %p188 = por %p186, %p187
      %p189 = scmp.ne.s32.totalorder %s178, %s181
      %p190 = scmp.eq.s32.totalorder %s21, 1
      %p191 = por %p189, %p190
      %p192 = scmp.ne.s32.totalorder %s181, %s182
      %p193 = scmp.eq.s32.totalorder %s21, 0
      %p194 = por %p192, %p193
      %p195 = scmp.ne.s32.totalorder %s181, %s182
      %p196 = scmp.eq.s32.totalorder %s22, 1
      %p197 = por %p195, %p196
      %p199 = scmp.ne.s32.totalorder %s182, %s198
      %p200 = scmp.eq.s32.totalorder %s22, 0
      %p201 = por %p199, %p200
      %p202 = scmp.le.s32.totalorder 1, %s16
      %p203 = scmp.lt.s32.totalorder %s16, 3
      %p204 = pnand %p202, %p203
      %p205 = pneg %p204
      // Predicated region
      $region9: #{tpu_custom_call.1} parent=5 // pred_check
        _
      $region10: #{tpu_custom_call.1} parent=5 // pred_check_branch
        %207 = sbr.rel (%p204) target = $region12
      $region11: #{tpu_custom_call.1} parent=5 // pred_region
        %s208 = ssub.s32 %s16, 1
        // Predicated region
        $region13: #{tpu_custom_call.1} parent=11 // pred_check
          %p209 = pneg %p63
        $region14: #{tpu_custom_call.1} parent=11 // pred_check_branch
          %211 = sbr.rel (%p209) target = $region16
        $region15: #{tpu_custom_call.1} parent=11 // pred_region
          _
        $region16: #{tpu_custom_call.1} parent=11 // pred_fallthru
          _
        // Predicated region
        $region17: #{tpu_custom_call.1} parent=11 // pred_check
          %p212 = pneg %p84
        $region18: #{tpu_custom_call.1} parent=11 // pred_check_branch
          %214 = sbr.rel (%p212) target = $region20
        $region19: #{tpu_custom_call.1} parent=11 // pred_region
          _
        $region20: #{tpu_custom_call.1} parent=11 // pred_fallthru
          _
        // Predicated region
        $region21: #{tpu_custom_call.1} parent=11 // pred_check
          %p215 = pneg %p105
        $region22: #{tpu_custom_call.1} parent=11 // pred_check_branch
          %217 = sbr.rel (%p215) target = $region24
        $region23: #{tpu_custom_call.1} parent=11 // pred_region
          _
        $region24: #{tpu_custom_call.1} parent=11 // pred_fallthru
          _
        // Predicated region
        $region25: #{tpu_custom_call.1} parent=11 // pred_check
          %p218 = pneg %p126
        $region26: #{tpu_custom_call.1} parent=11 // pred_check_branch
          %220 = sbr.rel (%p218) target = $region28
        $region27: #{tpu_custom_call.1} parent=11 // pred_region
          _
        $region28: #{tpu_custom_call.1} parent=11 // pred_fallthru
          _
        // Predicated region
        $region29: #{tpu_custom_call.1} parent=11 // pred_check
          %p221 = pneg %p147
        $region30: #{tpu_custom_call.1} parent=11 // pred_check_branch
          %223 = sbr.rel (%p221) target = $region32
        $region31: #{tpu_custom_call.1} parent=11 // pred_region
          _
        $region32: #{tpu_custom_call.1} parent=11 // pred_fallthru
          _
        // Predicated region
        $region33: #{tpu_custom_call.1} parent=11 // pred_check
          %p224 = pneg %p168
        $region34: #{tpu_custom_call.1} parent=11 // pred_check_branch
          %226 = sbr.rel (%p224) target = $region36
        $region35: #{tpu_custom_call.1} parent=11 // pred_region
          _
        $region36: #{tpu_custom_call.1} parent=11 // pred_fallthru
          _
      $region12: #{tpu_custom_call.1} parent=5 // pred_fallthru
        _
      %p227 = scmp.lt.s32.totalorder %s16, 2
      // Predicated region
      $region37: #{tpu_custom_call.1} parent=5 // pred_check
        %p228 = pneg %p227
      $region38: #{tpu_custom_call.1} parent=5 // pred_check_branch
        %230 = sbr.rel (%p228) target = $region40
      $region39: #{tpu_custom_call.1} parent=5 // pred_region
        // Predicated region
        $region41: #{tpu_custom_call.1} parent=39 // pred_check
          %p231 = pneg %p36
        $region42: #{tpu_custom_call.1} parent=39 // pred_check_branch
          %233 = sbr.rel (%p231) target = $region44
        $region43: #{tpu_custom_call.1} parent=39 // pred_region
          %s234 = smul.u32 64, %s16
          %p235 = scmp.lt.s32.totalorder %s234, 127
          %s236 = scalar_select %p235, %s234, 127
          %s237 = smul.addr %s236, 8
          %s238 = scalar_lea.vmem %s0, %s237
          %s239 = smul.u32 64, %s16
        $region44: #{tpu_custom_call.1} parent=39 // pred_fallthru
          _
      $region40: #{tpu_custom_call.1} parent=5 // pred_fallthru
        _
      %p240 = scmp.le.s32.totalorder 1, %s16
      %p241 = scmp.lt.s32.totalorder %s16, 3
      %p242 = pnand %p240, %p241
      %p243 = pneg %p242
      // Predicated region
      $region45: #{tpu_custom_call.1} parent=5 // pred_check
        _
      $region46: #{tpu_custom_call.1} parent=5 // pred_check_branch
        %245 = sbr.rel (%p242) target = $region48
      $region47: #{tpu_custom_call.1} parent=5 // pred_region
        %s246 = ssub.s32 %s16, 1
        %s247 = smul.u32 64, %s21
        %p248 = scmp.lt.s32.totalorder %s247, 127
        %s249 = scalar_select %p248, %s247, 127
        %s250 = smul.addr %s249, 8
        %s251 = scalar_lea.vmem %s0, %s250
        %p252 = pneg %p42
        %p253 = pneg %p39
        %p254 = pneg %p63
        %p255 = pneg %p60
        %p256 = pneg %p84
        %p257 = pneg %p81
        %p258 = pneg %p105
        %p259 = pneg %p102
        %p260 = pneg %p126
        %p261 = pneg %p123
        %p262 = pneg %p147
        %p263 = pneg %p144
        %p264 = pneg %p168
        %p265 = pneg %p165
        %p266 = pneg %p194
        %p267 = pneg %p191
        %s268 = sand.u32 %s181, 1
        %s269 = scalar_lea.sflag [#allocation3], %s268
        %s270 = sand.u32 %s181, 1
        %s271 = smul.addr %s270, 8
        %s272 = scalar_lea.vmem [#allocation2], %s271
        %s273 = smul.u32 64, %s21
        %p274 = scmp.lt.s32.totalorder %s273, 127
        %s275 = scalar_select %p274, %s273, 127
        %s276 = smul.addr %s275, 8
        %s277 = scalar_lea.vmem %s0, %s276
        %s278 = smul.u32 64, %s21
        %v279 = vld [vmem:[%s277] sm:$0xff]
        %v280 = vld [vmem:[%s277 + $0x8] sm:$0xff]
        %v281 = vld [vmem:[%s277 + $0x10] sm:$0xff]
        %v282 = vld [vmem:[%s277 + $0x18] sm:$0xff]
        %v283 = vld [vmem:[%s277 + $0x20] sm:$0xff]
        %v284 = vld [vmem:[%s277 + $0x28] sm:$0xff]
        %v285 = vld [vmem:[%s277 + $0x30] sm:$0xff]
        %v286 = vld [vmem:[%s277 + $0x38] sm:$0xff]
        %v287 = vld [vmem:[%s277 + $0x40] sm:$0xff]
        %v288 = vld [vmem:[%s277 + $0x48] sm:$0xff]
        %v289 = vld [vmem:[%s277 + $0x50] sm:$0xff]
        %v290 = vld [vmem:[%s277 + $0x58] sm:$0xff]
        %v291 = vld [vmem:[%s277 + $0x60] sm:$0xff]
        %v292 = vld [vmem:[%s277 + $0x68] sm:$0xff]
        %v293 = vld [vmem:[%s277 + $0x70] sm:$0xff]
        %v294 = vld [vmem:[%s277 + $0x78] sm:$0xff]
        %v295 = vld [vmem:[%s277 + $0x80] sm:$0xff]
        %v296 = vld [vmem:[%s277 + $0x88] sm:$0xff]
        %v297 = vld [vmem:[%s277 + $0x90] sm:$0xff]
        %v298 = vld [vmem:[%s277 + $0x98] sm:$0xff]
        %v299 = vld [vmem:[%s277 + $0xa0] sm:$0xff]
        %v300 = vld [vmem:[%s277 + $0xa8] sm:$0xff]
        %v301 = vld [vmem:[%s277 + $0xb0] sm:$0xff]
        %v302 = vld [vmem:[%s277 + $0xb8] sm:$0xff]
        %v303 = vld [vmem:[%s277 + $0xc0] sm:$0xff]
        %v304 = vld [vmem:[%s277 + $0xc8] sm:$0xff]
        %v305 = vld [vmem:[%s277 + $0xd0] sm:$0xff]
        %v306 = vld [vmem:[%s277 + $0xd8] sm:$0xff]
        %v307 = vld [vmem:[%s277 + $0xe0] sm:$0xff]
        %v308 = vld [vmem:[%s277 + $0xe8] sm:$0xff]
        %v309 = vld [vmem:[%s277 + $0xf0] sm:$0xff]
        %v310 = vld [vmem:[%s277 + $0xf8] sm:$0xff]
        %v311 = vld [vmem:[%s277 + $0x100] sm:$0xff]
        %v312 = vld [vmem:[%s277 + $0x108] sm:$0xff]
        %v313 = vld [vmem:[%s277 + $0x110] sm:$0xff]
        %v314 = vld [vmem:[%s277 + $0x118] sm:$0xff]
        %v315 = vld [vmem:[%s277 + $0x120] sm:$0xff]
        %v316 = vld [vmem:[%s277 + $0x128] sm:$0xff]
        %v317 = vld [vmem:[%s277 + $0x130] sm:$0xff]
        %v318 = vld [vmem:[%s277 + $0x138] sm:$0xff]
        %v319 = vld [vmem:[%s277 + $0x140] sm:$0xff]
        %v320 = vld [vmem:[%s277 + $0x148] sm:$0xff]
        %v321 = vld [vmem:[%s277 + $0x150] sm:$0xff]
        %v322 = vld [vmem:[%s277 + $0x158] sm:$0xff]
        %v323 = vld [vmem:[%s277 + $0x160] sm:$0xff]
        %v324 = vld [vmem:[%s277 + $0x168] sm:$0xff]
        %v325 = vld [vmem:[%s277 + $0x170] sm:$0xff]
        %v326 = vld [vmem:[%s277 + $0x178] sm:$0xff]
        %v327 = vld [vmem:[%s277 + $0x180] sm:$0xff]
        %v328 = vld [vmem:[%s277 + $0x188] sm:$0xff]
        %v329 = vld [vmem:[%s277 + $0x190] sm:$0xff]
        %v330 = vld [vmem:[%s277 + $0x198] sm:$0xff]
        %v331 = vld [vmem:[%s277 + $0x1a0] sm:$0xff]
        %v332 = vld [vmem:[%s277 + $0x1a8] sm:$0xff]
        %v333 = vld [vmem:[%s277 + $0x1b0] sm:$0xff]
        %v334 = vld [vmem:[%s277 + $0x1b8] sm:$0xff]
        %v335 = vld [vmem:[%s277 + $0x1c0] sm:$0xff]
        %v336 = vld [vmem:[%s277 + $0x1c8] sm:$0xff]
        %v337 = vld [vmem:[%s277 + $0x1d0] sm:$0xff]
        %v338 = vld [vmem:[%s277 + $0x1d8] sm:$0xff]
        %v339 = vld [vmem:[%s277 + $0x1e0] sm:$0xff]
        %v340 = vld [vmem:[%s277 + $0x1e8] sm:$0xff]
        %v341 = vld [vmem:[%s277 + $0x1f0] sm:$0xff]
        %v342 = vld [vmem:[%s277 + $0x1f8] sm:$0xff]
        %v343 = vld [vmem:[%s1] sm:$0xff]
        %v344 = vld [vmem:[%s1 + $0x8] sm:$0xff]
        %v345 = vld [vmem:[%s1 + $0x10] sm:$0xff]
        %v346 = vld [vmem:[%s1 + $0x18] sm:$0xff]
        %v347 = vld [vmem:[%s2] sm:$0x1]
        %v349 = vlaneseq
        %v350 = vshrl.u32 %v349, 7
        %v351 = vsub.s32 0, %v350
        %v352 = vrot.slane %v347, %v351
        %vm354 = vcmask 261120
        %v356 = vsel %vm354, %v279, 0
        %v359 = vsel %vm354, %v280, 0
        %v362 = vsel %vm354, %v281, 0
        %v365 = vsel %vm354, %v282, 0
        %v368 = vsel %vm354, %v283, 0
        %v371 = vsel %vm354, %v284, 0
        %v374 = vsel %vm354, %v285, 0
        %v377 = vsel %vm354, %v286, 0
        %v380 = vsel %vm354, %v287, 0
        %v383 = vsel %vm354, %v288, 0
        %v386 = vsel %vm354, %v289, 0
        %v389 = vsel %vm354, %v290, 0
        %v392 = vsel %vm354, %v291, 0
        %v395 = vsel %vm354, %v292, 0
        %v398 = vsel %vm354, %v293, 0
        %v401 = vsel %vm354, %v294, 0
        %v404 = vsel %vm354, %v295, 0
        %v407 = vsel %vm354, %v296, 0
        %v410 = vsel %vm354, %v297, 0
        %v413 = vsel %vm354, %v298, 0
        %v416 = vsel %vm354, %v299, 0
        %v419 = vsel %vm354, %v300, 0
        %v422 = vsel %vm354, %v301, 0
        %v425 = vsel %vm354, %v302, 0
        %v428 = vsel %vm354, %v303, 0
        %v431 = vsel %vm354, %v304, 0
        %v434 = vsel %vm354, %v305, 0
        %v437 = vsel %vm354, %v306, 0
        %v440 = vsel %vm354, %v307, 0
        %v443 = vsel %vm354, %v308, 0
        %v446 = vsel %vm354, %v309, 0
        %v449 = vsel %vm354, %v310, 0
        %v452 = vsel %vm354, %v311, 0
        %v455 = vsel %vm354, %v312, 0
        %v458 = vsel %vm354, %v313, 0
        %v461 = vsel %vm354, %v314, 0
        %v464 = vsel %vm354, %v315, 0
        %v467 = vsel %vm354, %v316, 0
        %v470 = vsel %vm354, %v317, 0
        %v473 = vsel %vm354, %v318, 0
        %v476 = vsel %vm354, %v319, 0
        %v479 = vsel %vm354, %v320, 0
        %v482 = vsel %vm354, %v321, 0
        %v485 = vsel %vm354, %v322, 0
        %v488 = vsel %vm354, %v323, 0
        %v491 = vsel %vm354, %v324, 0
        %v494 = vsel %vm354, %v325, 0
        %v497 = vsel %vm354, %v326, 0
        %v500 = vsel %vm354, %v327, 0
        %v503 = vsel %vm354, %v328, 0
        %v506 = vsel %vm354, %v329, 0
        %v509 = vsel %vm354, %v330, 0
        %v512 = vsel %vm354, %v331, 0
        %v515 = vsel %vm354, %v332, 0
        %v518 = vsel %vm354, %v333, 0
        %v521 = vsel %vm354, %v334, 0
        %v524 = vsel %vm354, %v335, 0
        %v527 = vsel %vm354, %v336, 0
        %v530 = vsel %vm354, %v337, 0
        %v533 = vsel %vm354, %v338, 0
        %v536 = vsel %vm354, %v339, 0
        %v539 = vsel %vm354, %v340, 0
        %v542 = vsel %vm354, %v341, 0
        %v545 = vsel %vm354, %v342, 0
        %547 = vmatprep.subr.mxu0 0.0
        %548 = vmatpush1.msra.mxu0 %v343
        %549 = vmatprep.subr.mxu0 0.0
        %550 = vmatpush1.msra.mxu0 %v344
        %551 = vmatprep.subr.mxu0 0.0
        %552 = vmatpush1.msra.mxu0 %v345
        %553 = vmatprep.subr.mxu0 0.0
        %554 = vmatpush1.msra.mxu0 %v346
        %555 = vmatprep.subr.mxu0 0.0
        %556 = vmatpush1.msra.mxu0 0.0
        %557 = vmatprep.subr.mxu0 0.0
        %558 = vmatpush1.msra.mxu0 0.0
        %559 = vmatprep.subr.mxu0 0.0
        %560 = vmatpush1.msra.mxu0 0.0
        %561 = vmatprep.subr.mxu0 0.0
        %562 = vmatpush1.msra.mxu0 0.0
        %563 = vmatprep.subr.mxu0 0.0
        %564 = vmatpush1.msra.mxu0 0.0
        %565 = vmatprep.subr.mxu0 0.0
        %566 = vmatpush1.msra.mxu0 0.0
        %567 = vmatprep.subr.mxu0 0.0
        %568 = vmatpush1.msra.mxu0 0.0
        %569 = vmatprep.subr.mxu0 0.0
        %570 = vmatpush1.msra.mxu0 0.0
        %571 = vmatprep.subr.mxu0 0.0
        %572 = vmatpush1.msra.mxu0 0.0
        %573 = vmatprep.subr.mxu0 0.0
        %574 = vmatpush1.msra.mxu0 0.0
        %575 = vmatprep.subr.mxu0 0.0
        %576 = vmatpush1.msra.mxu0 0.0
        %577 = vmatprep.subr.mxu0 0.0
        %578 = vmatpush1.msra.mxu0 0.0
        %579 = vmatprep.subr.mxu0 0.0
        %580 = vmatpush1.msra.mxu0 0.0
        %581 = vmatprep.subr.mxu0 0.0
        %582 = vmatpush1.msra.mxu0 0.0
        %583 = vmatprep.subr.mxu0 0.0
        %584 = vmatpush1.msra.mxu0 0.0
        %585 = vmatprep.subr.mxu0 0.0
        %586 = vmatpush1.msra.mxu0 0.0
        %587 = vmatprep.subr.mxu0 0.0
        %588 = vmatpush1.msra.mxu0 0.0
        %589 = vmatprep.subr.mxu0 0.0
        %590 = vmatpush1.msra.mxu0 0.0
        %591 = vmatprep.subr.mxu0 0.0
        %592 = vmatpush1.msra.mxu0 0.0
        %593 = vmatprep.subr.mxu0 0.0
        %594 = vmatpush1.msra.mxu0 0.0
        %595 = vmatprep.subr.mxu0 0.0
        %596 = vmatpush1.msra.mxu0 0.0
        %597 = vmatprep.subr.mxu0 0.0
        %598 = vmatpush1.msra.mxu0 0.0
        %599 = vmatprep.subr.mxu0 0.0
        %600 = vmatpush1.msra.mxu0 0.0
        %601 = vmatprep.subr.mxu0 0.0
        %602 = vmatpush1.msra.mxu0 0.0
        %603 = vmatprep.subr.mxu0 0.0
        %604 = vmatpush1.msra.mxu0 0.0
        %605 = vmatprep.subr.mxu0 0.0
        %606 = vmatpush1.msra.mxu0 0.0
        %607 = vmatprep.subr.mxu0 0.0
        %608 = vmatpush1.msra.mxu0 0.0
        %609 = vmatprep.subr.mxu0 0.0
        %610 = vmatpush1.msra.mxu0 0.0
        %611 = vmatprep.mubr.f32.mxu0 0.0
        %612 = vmatmul.mubr.f32.gmra.mrb[0].mxu0 %v356
        %v613 = vpop.f32.mrb[0].mxu0
        %v614 = vadd.f32 %v352, %v613
        %v615 = vpop.f32.mrb[0].mxu0
        %616 = vmatprep.mubr.f32.mxu0 0.0
        %617 = vmatmul.mubr.f32.gmra.mrb[0].mxu0 %v359
        %v618 = vpop.f32.mrb[0].mxu0
        %v619 = vadd.f32 %v352, %v618
        %v620 = vpop.f32.mrb[0].mxu0
        %621 = vmatprep.mubr.f32.mxu0 0.0
        %622 = vmatmul.mubr.f32.gmra.mrb[0].mxu0 %v362
        %v623 = vpop.f32.mrb[0].mxu0
        %v624 = vadd.f32 %v352, %v623
        %v625 = vpop.f32.mrb[0].mxu0
        %626 = vmatprep.mubr.f32.mxu0 0.0
        %627 = vmatmul.mubr.f32.gmra.mrb[0].mxu0 %v365
        %v628 = vpop.f32.mrb[0].mxu0
        %v629 = vadd.f32 %v352, %v628
        %v630 = vpop.f32.mrb[0].mxu0
        %631 = vmatprep.mubr.f32.mxu0 0.0
        %632 = vmatmul.mubr.f32.gmra.mrb[0].mxu0 %v368
        %v633 = vpop.f32.mrb[0].mxu0
        %v634 = vadd.f32 %v352, %v633
        %v635 = vpop.f32.mrb[0].mxu0
        %636 = vmatprep.mubr.f32.mxu0 0.0
        %637 = vmatmul.mubr.f32.gmra.mrb[0].mxu0 %v371
        %v638 = vpop.f32.mrb[0].mxu0
        %v639 = vadd.f32 %v352, %v638
        %v640 = vpop.f32.mrb[0].mxu0
        %641 = vmatprep.mubr.f32.mxu0 0.0
        %642 = vmatmul.mubr.f32.gmra.mrb[0].mxu0 %v374
        %v643 = vpop.f32.mrb[0].mxu0
        %v644 = vadd.f32 %v352, %v643
        %v645 = vpop.f32.mrb[0].mxu0
        %646 = vmatprep.mubr.f32.mxu0 0.0
        %647 = vmatmul.mubr.f32.gmra.mrb[0].mxu0 %v377
        %v648 = vpop.f32.mrb[0].mxu0
        %v649 = vadd.f32 %v352, %v648
        %v650 = vpop.f32.mrb[0].mxu0
        %651 = vmatprep.mubr.f32.mxu0 0.0
        %652 = vmatmul.mubr.f32.gmra.mrb[0].mxu0 %v380
        %v653 = vpop.f32.mrb[0].mxu0
        %v654 = vadd.f32 %v352, %v653
        %v655 = vpop.f32.mrb[0].mxu0
        %656 = vmatprep.mubr.f32.mxu0 0.0
        %657 = vmatmul.mubr.f32.gmra.mrb[0].mxu0 %v383
        %v658 = vpop.f32.mrb[0].mxu0
        %v659 = vadd.f32 %v352, %v658
        %v660 = vpop.f32.mrb[0].mxu0
        %661 = vmatprep.mubr.f32.mxu0 0.0
        %662 = vmatmul.mubr.f32.gmra.mrb[0].mxu0 %v386
        %v663 = vpop.f32.mrb[0].mxu0
        %v664 = vadd.f32 %v352, %v663
        %v665 = vpop.f32.mrb[0].mxu0
        %666 = vmatprep.mubr.f32.mxu0 0.0
        %667 = vmatmul.mubr.f32.gmra.mrb[0].mxu0 %v389
        %v668 = vpop.f32.mrb[0].mxu0
        %v669 = vadd.f32 %v352, %v668
        %v670 = vpop.f32.mrb[0].mxu0
        %671 = vmatprep.mubr.f32.mxu0 0.0
        %672 = vmatmul.mubr.f32.gmra.mrb[0].mxu0 %v392
        %v673 = vpop.f32.mrb[0].mxu0
        %v674 = vadd.f32 %v352, %v673
        %v675 = vpop.f32.mrb[0].mxu0
        %676 = vmatprep.mubr.f32.mxu0 0.0
        %677 = vmatmul.mubr.f32.gmra.mrb[0].mxu0 %v395
        %v678 = vpop.f32.mrb[0].mxu0
        %v679 = vadd.f32 %v352, %v678
        %v680 = vpop.f32.mrb[0].mxu0
        %681 = vmatprep.mubr.f32.mxu0 0.0
        %682 = vmatmul.mubr.f32.gmra.mrb[0].mxu0 %v398
        %v683 = vpop.f32.mrb[0].mxu0
        %v684 = vadd.f32 %v352, %v683
        %v685 = vpop.f32.mrb[0].mxu0
        %686 = vmatprep.mubr.f32.mxu0 0.0
        %687 = vmatmul.mubr.f32.gmra.mrb[0].mxu0 %v401
        %v688 = vpop.f32.mrb[0].mxu0
        %v689 = vadd.f32 %v352, %v688
        %v690 = vpop.f32.mrb[0].mxu0
        %691 = vmatprep.mubr.f32.mxu0 0.0
        %692 = vmatmul.mubr.f32.gmra.mrb[0].mxu0 %v404
        %v693 = vpop.f32.mrb[0].mxu0
        %v694 = vadd.f32 %v352, %v693
        %v695 = vpop.f32.mrb[0].mxu0
        %696 = vmatprep.mubr.f32.mxu0 0.0
        %697 = vmatmul.mubr.f32.gmra.mrb[0].mxu0 %v407
        %v698 = vpop.f32.mrb[0].mxu0
        %v699 = vadd.f32 %v352, %v698
        %v700 = vpop.f32.mrb[0].mxu0
        %701 = vmatprep.mubr.f32.mxu0 0.0
        %702 = vmatmul.mubr.f32.gmra.mrb[0].mxu0 %v410
        %v703 = vpop.f32.mrb[0].mxu0
        %v704 = vadd.f32 %v352, %v703
        %v705 = vpop.f32.mrb[0].mxu0
        %706 = vmatprep.mubr.f32.mxu0 0.0
        %707 = vmatmul.mubr.f32.gmra.mrb[0].mxu0 %v413
        %v708 = vpop.f32.mrb[0].mxu0
        %v709 = vadd.f32 %v352, %v708
        %v710 = vpop.f32.mrb[0].mxu0
        %711 = vmatprep.mubr.f32.mxu0 0.0
        %712 = vmatmul.mubr.f32.gmra.mrb[0].mxu0 %v416
        %v713 = vpop.f32.mrb[0].mxu0
        %v714 = vadd.f32 %v352, %v713
        %v715 = vpop.f32.mrb[0].mxu0
        %716 = vmatprep.mubr.f32.mxu0 0.0
        %717 = vmatmul.mubr.f32.gmra.mrb[0].mxu0 %v419
        %v718 = vpop.f32.mrb[0].mxu0
        %v719 = vadd.f32 %v352, %v718
        %v720 = vpop.f32.mrb[0].mxu0
        %721 = vmatprep.mubr.f32.mxu0 0.0
        %722 = vmatmul.mubr.f32.gmra.mrb[0].mxu0 %v422
        %v723 = vpop.f32.mrb[0].mxu0
        %v724 = vadd.f32 %v352, %v723
        %v725 = vpop.f32.mrb[0].mxu0
        %726 = vmatprep.mubr.f32.mxu0 0.0
        %727 = vmatmul.mubr.f32.gmra.mrb[0].mxu0 %v425
        %v728 = vpop.f32.mrb[0].mxu0
        %v729 = vadd.f32 %v352, %v728
        %v730 = vpop.f32.mrb[0].mxu0
        %731 = vmatprep.mubr.f32.mxu0 0.0
        %732 = vmatmul.mubr.f32.gmra.mrb[0].mxu0 %v428
        %v733 = vpop.f32.mrb[0].mxu0
        %v734 = vadd.f32 %v352, %v733
        %v735 = vpop.f32.mrb[0].mxu0
        %736 = vmatprep.mubr.f32.mxu0 0.0
        %737 = vmatmul.mubr.f32.gmra.mrb[0].mxu0 %v431
        %v738 = vpop.f32.mrb[0].mxu0
        %v739 = vadd.f32 %v352, %v738
        %v740 = vpop.f32.mrb[0].mxu0
        %741 = vmatprep.mubr.f32.mxu0 0.0
        %742 = vmatmul.mubr.f32.gmra.mrb[0].mxu0 %v434
        %v743 = vpop.f32.mrb[0].mxu0
        %v744 = vadd.f32 %v352, %v743
        %v745 = vpop.f32.mrb[0].mxu0
        %746 = vmatprep.mubr.f32.mxu0 0.0
        %747 = vmatmul.mubr.f32.gmra.mrb[0].mxu0 %v437
        %v748 = vpop.f32.mrb[0].mxu0
        %v749 = vadd.f32 %v352, %v748
        %v750 = vpop.f32.mrb[0].mxu0
        %751 = vmatprep.mubr.f32.mxu0 0.0
        %752 = vmatmul.mubr.f32.gmra.mrb[0].mxu0 %v440
        %v753 = vpop.f32.mrb[0].mxu0
        %v754 = vadd.f32 %v352, %v753
        %v755 = vpop.f32.mrb[0].mxu0
        %756 = vmatprep.mubr.f32.mxu0 0.0
        %757 = vmatmul.mubr.f32.gmra.mrb[0].mxu0 %v443
        %v758 = vpop.f32.mrb[0].mxu0
        %v759 = vadd.f32 %v352, %v758
        %v760 = vpop.f32.mrb[0].mxu0
        %761 = vmatprep.mubr.f32.mxu0 0.0
        %762 = vmatmul.mubr.f32.gmra.mrb[0].mxu0 %v446
        %v763 = vpop.f32.mrb[0].mxu0
        %v764 = vadd.f32 %v352, %v763
        %v765 = vpop.f32.mrb[0].mxu0
        %766 = vmatprep.mubr.f32.mxu0 0.0
        %767 = vmatmul.mubr.f32.gmra.mrb[0].mxu0 %v449
        %v768 = vpop.f32.mrb[0].mxu0
        %v769 = vadd.f32 %v352, %v768
        %v770 = vpop.f32.mrb[0].mxu0
        %771 = vmatprep.mubr.f32.mxu0 0.0
        %772 = vmatmul.mubr.f32.gmra.mrb[0].mxu0 %v452
        %v773 = vpop.f32.mrb[0].mxu0
        %v774 = vadd.f32 %v352, %v773
        %v775 = vpop.f32.mrb[0].mxu0
        %776 = vmatprep.mubr.f32.mxu0 0.0
        %777 = vmatmul.mubr.f32.gmra.mrb[0].mxu0 %v455
        %v778 = vpop.f32.mrb[0].mxu0
        %v779 = vadd.f32 %v352, %v778
        %v780 = vpop.f32.mrb[0].mxu0
        %781 = vmatprep.mubr.f32.mxu0 0.0
        %782 = vmatmul.mubr.f32.gmra.mrb[0].mxu0 %v458
        %v783 = vpop.f32.mrb[0].mxu0
        %v784 = vadd.f32 %v352, %v783
        %v785 = vpop.f32.mrb[0].mxu0
        %786 = vmatprep.mubr.f32.mxu0 0.0
        %787 = vmatmul.mubr.f32.gmra.mrb[0].mxu0 %v461
        %v788 = vpop.f32.mrb[0].mxu0
        %v789 = vadd.f32 %v352, %v788
        %v790 = vpop.f32.mrb[0].mxu0
        %791 = vmatprep.mubr.f32.mxu0 0.0
        %792 = vmatmul.mubr.f32.gmra.mrb[0].mxu0 %v464
        %v793 = vpop.f32.mrb[0].mxu0
        %v794 = vadd.f32 %v352, %v793
        %v795 = vpop.f32.mrb[0].mxu0
        %796 = vmatprep.mubr.f32.mxu0 0.0
        %797 = vmatmul.mubr.f32.gmra.mrb[0].mxu0 %v467
        %v798 = vpop.f32.mrb[0].mxu0
        %v799 = vadd.f32 %v352, %v798
        %v800 = vpop.f32.mrb[0].mxu0
        %801 = vmatprep.mubr.f32.mxu0 0.0
        %802 = vmatmul.mubr.f32.gmra.mrb[0].mxu0 %v470
        %v803 = vpop.f32.mrb[0].mxu0
        %v804 = vadd.f32 %v352, %v803
        %v805 = vpop.f32.mrb[0].mxu0
        %806 = vmatprep.mubr.f32.mxu0 0.0
        %807 = vmatmul.mubr.f32.gmra.mrb[0].mxu0 %v473
        %v808 = vpop.f32.mrb[0].mxu0
        %v809 = vadd.f32 %v352, %v808
        %v810 = vpop.f32.mrb[0].mxu0
        %811 = vmatprep.mubr.f32.mxu0 0.0
        %812 = vmatmul.mubr.f32.gmra.mrb[0].mxu0 %v476
        %v813 = vpop.f32.mrb[0].mxu0
        %v814 = vadd.f32 %v352, %v813
        %v815 = vpop.f32.mrb[0].mxu0
        %816 = vmatprep.mubr.f32.mxu0 0.0
        %817 = vmatmul.mubr.f32.gmra.mrb[0].mxu0 %v479
        %v818 = vpop.f32.mrb[0].mxu0
        %v819 = vadd.f32 %v352, %v818
        %v820 = vpop.f32.mrb[0].mxu0
        %821 = vmatprep.mubr.f32.mxu0 0.0
        %822 = vmatmul.mubr.f32.gmra.mrb[0].mxu0 %v482
        %v823 = vpop.f32.mrb[0].mxu0
        %v824 = vadd.f32 %v352, %v823
        %v825 = vpop.f32.mrb[0].mxu0
        %826 = vmatprep.mubr.f32.mxu0 0.0
        %827 = vmatmul.mubr.f32.gmra.mrb[0].mxu0 %v485
        %v828 = vpop.f32.mrb[0].mxu0
        %v829 = vadd.f32 %v352, %v828
        %v830 = vpop.f32.mrb[0].mxu0
        %831 = vmatprep.mubr.f32.mxu0 0.0
        %832 = vmatmul.mubr.f32.gmra.mrb[0].mxu0 %v488
        %v833 = vpop.f32.mrb[0].mxu0
        %v834 = vadd.f32 %v352, %v833
        %v835 = vpop.f32.mrb[0].mxu0
        %836 = vmatprep.mubr.f32.mxu0 0.0
        %837 = vmatmul.mubr.f32.gmra.mrb[0].mxu0 %v491
        %v838 = vpop.f32.mrb[0].mxu0
        %v839 = vadd.f32 %v352, %v838
        %v840 = vpop.f32.mrb[0].mxu0
        %841 = vmatprep.mubr.f32.mxu0 0.0
        %842 = vmatmul.mubr.f32.gmra.mrb[0].mxu0 %v494
        %v843 = vpop.f32.mrb[0].mxu0
        %v844 = vadd.f32 %v352, %v843
        %v845 = vpop.f32.mrb[0].mxu0
        %846 = vmatprep.mubr.f32.mxu0 0.0
        %847 = vmatmul.mubr.f32.gmra.mrb[0].mxu0 %v497
        %v848 = vpop.f32.mrb[0].mxu0
        %v849 = vadd.f32 %v352, %v848
        %v850 = vpop.f32.mrb[0].mxu0
        %851 = vmatprep.mubr.f32.mxu0 0.0
        %852 = vmatmul.mubr.f32.gmra.mrb[0].mxu0 %v500
        %v853 = vpop.f32.mrb[0].mxu0
        %v854 = vadd.f32 %v352, %v853
        %v855 = vpop.f32.mrb[0].mxu0
        %856 = vmatprep.mubr.f32.mxu0 0.0
        %857 = vmatmul.mubr.f32.gmra.mrb[0].mxu0 %v503
        %v858 = vpop.f32.mrb[0].mxu0
        %v859 = vadd.f32 %v352, %v858
        %v860 = vpop.f32.mrb[0].mxu0
        %861 = vmatprep.mubr.f32.mxu0 0.0
        %862 = vmatmul.mubr.f32.gmra.mrb[0].mxu0 %v506
        %v863 = vpop.f32.mrb[0].mxu0
        %v864 = vadd.f32 %v352, %v863
        %v865 = vpop.f32.mrb[0].mxu0
        %866 = vmatprep.mubr.f32.mxu0 0.0
        %867 = vmatmul.mubr.f32.gmra.mrb[0].mxu0 %v509
        %v868 = vpop.f32.mrb[0].mxu0
        %v869 = vadd.f32 %v352, %v868
        %v870 = vpop.f32.mrb[0].mxu0
        %871 = vmatprep.mubr.f32.mxu0 0.0
        %872 = vmatmul.mubr.f32.gmra.mrb[0].mxu0 %v512
        %v873 = vpop.f32.mrb[0].mxu0
        %v874 = vadd.f32 %v352, %v873
        %v875 = vpop.f32.mrb[0].mxu0
        %876 = vmatprep.mubr.f32.mxu0 0.0
        %877 = vmatmul.mubr.f32.gmra.mrb[0].mxu0 %v515
        %v878 = vpop.f32.mrb[0].mxu0
        %v879 = vadd.f32 %v352, %v878
        %v880 = vpop.f32.mrb[0].mxu0
        %881 = vmatprep.mubr.f32.mxu0 0.0
        %882 = vmatmul.mubr.f32.gmra.mrb[0].mxu0 %v518
        %v883 = vpop.f32.mrb[0].mxu0
        %v884 = vadd.f32 %v352, %v883
        %v885 = vpop.f32.mrb[0].mxu0
        %886 = vmatprep.mubr.f32.mxu0 0.0
        %887 = vmatmul.mubr.f32.gmra.mrb[0].mxu0 %v521
        %v888 = vpop.f32.mrb[0].mxu0
        %v889 = vadd.f32 %v352, %v888
        %v890 = vpop.f32.mrb[0].mxu0
        %891 = vmatprep.mubr.f32.mxu0 0.0
        %892 = vmatmul.mubr.f32.gmra.mrb[0].mxu0 %v524
        %v893 = vpop.f32.mrb[0].mxu0
        %v894 = vadd.f32 %v352, %v893
        %v895 = vpop.f32.mrb[0].mxu0
        %896 = vmatprep.mubr.f32.mxu0 0.0
        %897 = vmatmul.mubr.f32.gmra.mrb[0].mxu0 %v527
        %v898 = vpop.f32.mrb[0].mxu0
        %v899 = vadd.f32 %v352, %v898
        %v900 = vpop.f32.mrb[0].mxu0
        %901 = vmatprep.mubr.f32.mxu0 0.0
        %902 = vmatmul.mubr.f32.gmra.mrb[0].mxu0 %v530
        %v903 = vpop.f32.mrb[0].mxu0
        %v904 = vadd.f32 %v352, %v903
        %v905 = vpop.f32.mrb[0].mxu0
        %906 = vmatprep.mubr.f32.mxu0 0.0
        %907 = vmatmul.mubr.f32.gmra.mrb[0].mxu0 %v533
        %v908 = vpop.f32.mrb[0].mxu0
        %v909 = vadd.f32 %v352, %v908
        %v910 = vpop.f32.mrb[0].mxu0
        %911 = vmatprep.mubr.f32.mxu0 0.0
        %912 = vmatmul.mubr.f32.gmra.mrb[0].mxu0 %v536
        %v913 = vpop.f32.mrb[0].mxu0
        %v914 = vadd.f32 %v352, %v913
        %v915 = vpop.f32.mrb[0].mxu0
        %916 = vmatprep.mubr.f32.mxu0 0.0
        %917 = vmatmul.mubr.f32.gmra.mrb[0].mxu0 %v539
        %v918 = vpop.f32.mrb[0].mxu0
        %v919 = vadd.f32 %v352, %v918
        %v920 = vpop.f32.mrb[0].mxu0
        %921 = vmatprep.mubr.f32.mxu0 0.0
        %922 = vmatmul.mubr.f32.gmra.mrb[0].mxu0 %v542
        %v923 = vpop.f32.mrb[0].mxu0
        %v924 = vadd.f32 %v352, %v923
        %v925 = vpop.f32.mrb[0].mxu0
        %926 = vmatprep.mubr.f32.mxu0 0.0
        %927 = vmatmul.mubr.f32.gmra.mrb[0].mxu0 %v545
        %v928 = vpop.f32.mrb[0].mxu0
        %v929 = vadd.f32 %v352, %v928
        %v930 = vpop.f32.mrb[0].mxu0
        %931 = vdwg.mxu0
        %v932 = vmax.f32 %v614, 0.0
        %v933 = vmax.f32 %v619, 0.0
        %v934 = vmax.f32 %v624, 0.0
        %v935 = vmax.f32 %v629, 0.0
        %v936 = vmax.f32 %v634, 0.0
        %v937 = vmax.f32 %v639, 0.0
        %v938 = vmax.f32 %v644, 0.0
        %v939 = vmax.f32 %v649, 0.0
        %v940 = vmax.f32 %v654, 0.0
        %v941 = vmax.f32 %v659, 0.0
        %v942 = vmax.f32 %v664, 0.0
        %v943 = vmax.f32 %v669, 0.0
        %v944 = vmax.f32 %v674, 0.0
        %v945 = vmax.f32 %v679, 0.0
        %v946 = vmax.f32 %v684, 0.0
        %v947 = vmax.f32 %v689, 0.0
        %v948 = vmax.f32 %v694, 0.0
        %v949 = vmax.f32 %v699, 0.0
        %v950 = vmax.f32 %v704, 0.0
        %v951 = vmax.f32 %v709, 0.0
        %v952 = vmax.f32 %v714, 0.0
        %v953 = vmax.f32 %v719, 0.0
        %v954 = vmax.f32 %v724, 0.0
        %v955 = vmax.f32 %v729, 0.0
        %v956 = vmax.f32 %v734, 0.0
        %v957 = vmax.f32 %v739, 0.0
        %v958 = vmax.f32 %v744, 0.0
        %v959 = vmax.f32 %v749, 0.0
        %v960 = vmax.f32 %v754, 0.0
        %v961 = vmax.f32 %v759, 0.0
        %v962 = vmax.f32 %v764, 0.0
        %v963 = vmax.f32 %v769, 0.0
        %v964 = vmax.f32 %v774, 0.0
        %v965 = vmax.f32 %v779, 0.0
        %v966 = vmax.f32 %v784, 0.0
        %v967 = vmax.f32 %v789, 0.0
        %v968 = vmax.f32 %v794, 0.0
        %v969 = vmax.f32 %v799, 0.0
        %v970 = vmax.f32 %v804, 0.0
        %v971 = vmax.f32 %v809, 0.0
        %v972 = vmax.f32 %v814, 0.0
        %v973 = vmax.f32 %v819, 0.0
        %v974 = vmax.f32 %v824, 0.0
        %v975 = vmax.f32 %v829, 0.0
        %v976 = vmax.f32 %v834, 0.0
        %v977 = vmax.f32 %v839, 0.0
        %v978 = vmax.f32 %v844, 0.0
        %v979 = vmax.f32 %v849, 0.0
        %v980 = vmax.f32 %v854, 0.0
        %v981 = vmax.f32 %v859, 0.0
        %v982 = vmax.f32 %v864, 0.0
        %v983 = vmax.f32 %v869, 0.0
        %v984 = vmax.f32 %v874, 0.0
        %v985 = vmax.f32 %v879, 0.0
        %v986 = vmax.f32 %v884, 0.0
        %v987 = vmax.f32 %v889, 0.0
        %v988 = vmax.f32 %v894, 0.0
        %v989 = vmax.f32 %v899, 0.0
        %v990 = vmax.f32 %v904, 0.0
        %v991 = vmax.f32 %v909, 0.0
        %v992 = vmax.f32 %v914, 0.0
        %v993 = vmax.f32 %v919, 0.0
        %v994 = vmax.f32 %v924, 0.0
        %v995 = vmax.f32 %v929, 0.0
        %v996 = vadd.f32 %v932, %v933
        %v997 = vadd.f32 %v996, %v934
        %v998 = vadd.f32 %v997, %v935
        %v999 = vadd.f32 %v998, %v936
        %v1000 = vadd.f32 %v999, %v937
        %v1001 = vadd.f32 %v1000, %v938
        %v1002 = vadd.f32 %v1001, %v939
        %v1003 = vrot.slane %v1002, 4
        %v1004 = vadd.f32 %v1002, %v1003
        %v1005 = vrot.slane %v1004, 2
        %v1006 = vadd.f32 %v1004, %v1005
        %v1007 = vrot.slane %v1006, 1
        %v1008 = vadd.f32 %v1006, %v1007
        %v1009 = vadd.f32 %v940, %v941
        %v1010 = vadd.f32 %v1009, %v942
        %v1011 = vadd.f32 %v1010, %v943
        %v1012 = vadd.f32 %v1011, %v944
        %v1013 = vadd.f32 %v1012, %v945
        %v1014 = vadd.f32 %v1013, %v946
        %v1015 = vadd.f32 %v1014, %v947
        %v1016 = vrot.slane %v1015, 4
        %v1017 = vadd.f32 %v1015, %v1016
        %v1018 = vrot.slane %v1017, 2
        %v1019 = vadd.f32 %v1017, %v1018
        %v1020 = vrot.slane %v1019, 1
        %v1021 = vadd.f32 %v1019, %v1020
        %v1022 = vadd.f32 %v948, %v949
        %v1023 = vadd.f32 %v1022, %v950
        %v1024 = vadd.f32 %v1023, %v951
        %v1025 = vadd.f32 %v1024, %v952
        %v1026 = vadd.f32 %v1025, %v953
        %v1027 = vadd.f32 %v1026, %v954
        %v1028 = vadd.f32 %v1027, %v955
        %v1029 = vrot.slane %v1028, 4
        %v1030 = vadd.f32 %v1028, %v1029
        %v1031 = vrot.slane %v1030, 2
        %v1032 = vadd.f32 %v1030, %v1031
        %v1033 = vrot.slane %v1032, 1
        %v1034 = vadd.f32 %v1032, %v1033
        %v1035 = vadd.f32 %v956, %v957
        %v1036 = vadd.f32 %v1035, %v958
        %v1037 = vadd.f32 %v1036, %v959
        %v1038 = vadd.f32 %v1037, %v960
        %v1039 = vadd.f32 %v1038, %v961
        %v1040 = vadd.f32 %v1039, %v962
        %v1041 = vadd.f32 %v1040, %v963
        %v1042 = vrot.slane %v1041, 4
        %v1043 = vadd.f32 %v1041, %v1042
        %v1044 = vrot.slane %v1043, 2
        %v1045 = vadd.f32 %v1043, %v1044
        %v1046 = vrot.slane %v1045, 1
        %v1047 = vadd.f32 %v1045, %v1046
        %v1048 = vadd.f32 %v964, %v965
        %v1049 = vadd.f32 %v1048, %v966
        %v1050 = vadd.f32 %v1049, %v967
        %v1051 = vadd.f32 %v1050, %v968
        %v1052 = vadd.f32 %v1051, %v969
        %v1053 = vadd.f32 %v1052, %v970
        %v1054 = vadd.f32 %v1053, %v971
        %v1055 = vrot.slane %v1054, 4
        %v1056 = vadd.f32 %v1054, %v1055
        %v1057 = vrot.slane %v1056, 2
        %v1058 = vadd.f32 %v1056, %v1057
        %v1059 = vrot.slane %v1058, 1
        %v1060 = vadd.f32 %v1058, %v1059
        %v1061 = vadd.f32 %v972, %v973
        %v1062 = vadd.f32 %v1061, %v974
        %v1063 = vadd.f32 %v1062, %v975
        %v1064 = vadd.f32 %v1063, %v976
        %v1065 = vadd.f32 %v1064, %v977
        %v1066 = vadd.f32 %v1065, %v978
        %v1067 = vadd.f32 %v1066, %v979
        %v1068 = vrot.slane %v1067, 4
        %v1069 = vadd.f32 %v1067, %v1068
        %v1070 = vrot.slane %v1069, 2
        %v1071 = vadd.f32 %v1069, %v1070
        %v1072 = vrot.slane %v1071, 1
        %v1073 = vadd.f32 %v1071, %v1072
        %v1074 = vadd.f32 %v980, %v981
        %v1075 = vadd.f32 %v1074, %v982
        %v1076 = vadd.f32 %v1075, %v983
        %v1077 = vadd.f32 %v1076, %v984
        %v1078 = vadd.f32 %v1077, %v985
        %v1079 = vadd.f32 %v1078, %v986
        %v1080 = vadd.f32 %v1079, %v987
        %v1081 = vrot.slane %v1080, 4
        %v1082 = vadd.f32 %v1080, %v1081
        %v1083 = vrot.slane %v1082, 2
        %v1084 = vadd.f32 %v1082, %v1083
        %v1085 = vrot.slane %v1084, 1
        %v1086 = vadd.f32 %v1084, %v1085
        %v1087 = vadd.f32 %v988, %v989
        %v1088 = vadd.f32 %v1087, %v990
        %v1089 = vadd.f32 %v1088, %v991
        %v1090 = vadd.f32 %v1089, %v992
        %v1091 = vadd.f32 %v1090, %v993
        %v1092 = vadd.f32 %v1091, %v994
        %v1093 = vadd.f32 %v1092, %v995
        %v1094 = vrot.slane %v1093, 4
        %v1095 = vadd.f32 %v1093, %v1094
        %v1096 = vrot.slane %v1095, 2
        %v1097 = vadd.f32 %v1095, %v1096
        %v1098 = vrot.slane %v1097, 1
        %v1099 = vadd.f32 %v1097, %v1098
        %v1100 = vld [vmem:[%s3] sm:$0xff]
        %v1101 = vld [vmem:[%s3 + $0x8] sm:$0xff]
        %v1102 = vld [vmem:[%s3 + $0x10] sm:$0xff]
        %v1103 = vld [vmem:[%s3 + $0x18] sm:$0xff]
        %v1104 = vld [vmem:[%s3 + $0x20] sm:$0xff]
        %v1105 = vld [vmem:[%s3 + $0x28] sm:$0xff]
        %v1106 = vld [vmem:[%s3 + $0x30] sm:$0xff]
        %v1107 = vld [vmem:[%s3 + $0x38] sm:$0xff]
        %v1108 = vld [vmem:[%s3 + $0x40] sm:$0xff]
        %v1109 = vld [vmem:[%s3 + $0x48] sm:$0xff]
        %v1110 = vld [vmem:[%s3 + $0x50] sm:$0xff]
        %v1111 = vld [vmem:[%s3 + $0x58] sm:$0xff]
        %v1112 = vld [vmem:[%s3 + $0x60] sm:$0xff]
        %v1113 = vld [vmem:[%s3 + $0x68] sm:$0xff]
        %v1114 = vld [vmem:[%s3 + $0x70] sm:$0xff]
        %v1115 = vld [vmem:[%s3 + $0x78] sm:$0xff]
        %v1116 = vld [vmem:[%s4] sm:$0x1]
        %v1118 = vlaneseq
        %v1119 = vshrl.u32 %v1118, 7
        %v1120 = vsub.s32 0, %v1119
        %v1121 = vrot.slane %v1116, %v1120
        %vm1131 = vcmask 1041409
        %v1132 = vsel %vm1131, %v1021, %v1008
        %vm1133 = vcmask 1042434
        %v1134 = vsel %vm1133, %v1034, %v1132
        %vm1135 = vcmask 1043459
        %v1136 = vsel %vm1135, %v1047, %v1134
        %vm1137 = vcmask 1044484
        %v1138 = vsel %vm1137, %v1060, %v1136
        %vm1139 = vcmask 1045509
        %v1140 = vsel %vm1139, %v1073, %v1138
        %vm1141 = vcmask 1046534
        %v1142 = vsel %vm1141, %v1086, %v1140
        %vm1143 = vcmask 1047559
        %v1144 = vsel %vm1143, %v1099, %v1142
        %1146 = vmatprep.subr.mxu0 0.0
        %1147 = vmatpush1.msra.mxu0 %v1100
        %1148 = vmatprep.subr.mxu0 0.0
        %1149 = vmatpush1.msra.mxu0 %v1101
        %1150 = vmatprep.subr.mxu0 0.0
        %1151 = vmatpush1.msra.mxu0 %v1102
        %1152 = vmatprep.subr.mxu0 0.0
        %1153 = vmatpush1.msra.mxu0 %v1103
        %1154 = vmatprep.subr.mxu0 0.0
        %1155 = vmatpush1.msra.mxu0 %v1104
        %1156 = vmatprep.subr.mxu0 0.0
        %1157 = vmatpush1.msra.mxu0 %v1105
        %1158 = vmatprep.subr.mxu0 0.0
        %1159 = vmatpush1.msra.mxu0 %v1106
        %1160 = vmatprep.subr.mxu0 0.0
        %1161 = vmatpush1.msra.mxu0 %v1107
        %1162 = vmatprep.subr.mxu0 0.0
        %1163 = vmatpush1.msra.mxu0 %v1108
        %1164 = vmatprep.subr.mxu0 0.0
        %1165 = vmatpush1.msra.mxu0 %v1109
        %1166 = vmatprep.subr.mxu0 0.0
        %1167 = vmatpush1.msra.mxu0 %v1110
        %1168 = vmatprep.subr.mxu0 0.0
        %1169 = vmatpush1.msra.mxu0 %v1111
        %1170 = vmatprep.subr.mxu0 0.0
        %1171 = vmatpush1.msra.mxu0 %v1112
        %1172 = vmatprep.subr.mxu0 0.0
        %1173 = vmatpush1.msra.mxu0 %v1113
        %1174 = vmatprep.subr.mxu0 0.0
        %1175 = vmatpush1.msra.mxu0 %v1114
        %1176 = vmatprep.subr.mxu0 0.0
        %1177 = vmatpush1.msra.mxu0 %v1115
        %1178 = vmatprep.subr.mxu0 0.0
        %1179 = vmatpush1.msra.mxu0 0.0
        %1180 = vmatprep.subr.mxu0 0.0
        %1181 = vmatpush1.msra.mxu0 0.0
        %1182 = vmatprep.subr.mxu0 0.0
        %1183 = vmatpush1.msra.mxu0 0.0
        %1184 = vmatprep.subr.mxu0 0.0
        %1185 = vmatpush1.msra.mxu0 0.0
        %1186 = vmatprep.subr.mxu0 0.0
        %1187 = vmatpush1.msra.mxu0 0.0
        %1188 = vmatprep.subr.mxu0 0.0
        %1189 = vmatpush1.msra.mxu0 0.0
        %1190 = vmatprep.subr.mxu0 0.0
        %1191 = vmatpush1.msra.mxu0 0.0
        %1192 = vmatprep.subr.mxu0 0.0
        %1193 = vmatpush1.msra.mxu0 0.0
        %1194 = vmatprep.subr.mxu0 0.0
        %1195 = vmatpush1.msra.mxu0 0.0
        %1196 = vmatprep.subr.mxu0 0.0
        %1197 = vmatpush1.msra.mxu0 0.0
        %1198 = vmatprep.subr.mxu0 0.0
        %1199 = vmatpush1.msra.mxu0 0.0
        %1200 = vmatprep.subr.mxu0 0.0
        %1201 = vmatpush1.msra.mxu0 0.0
        %1202 = vmatprep.subr.mxu0 0.0
        %1203 = vmatpush1.msra.mxu0 0.0
        %1204 = vmatprep.subr.mxu0 0.0
        %1205 = vmatpush1.msra.mxu0 0.0
        %1206 = vmatprep.subr.mxu0 0.0
        %1207 = vmatpush1.msra.mxu0 0.0
        %1208 = vmatprep.subr.mxu0 0.0
        %1209 = vmatpush1.msra.mxu0 0.0
        %1210 = vmatprep.mubr.f32.mxu0 0.0
        %1211 = vmatmul.mubr.f32.gmra.mrb[0].mxu0 %v1144
        %v1212 = vpop.f32.mrb[0].mxu0
        %v1213 = vadd.f32 %v1121, %v1212
        %v1214 = vpop.f32.mrb[0].mxu0
        %1215 = vdwg.mxu0
        %v1216 = vld [vmem:[%s5] sm:$0xff]
        %v1217 = vld [vmem:[%s5 + $0x8] sm:$0xff]
        %v1218 = vld [vmem:[%s5 + $0x10] sm:$0xff]
        %v1219 = vld [vmem:[%s5 + $0x18] sm:$0xff]
        %v1220 = vld [vmem:[%s5 + $0x20] sm:$0xff]
        %v1221 = vld [vmem:[%s5 + $0x28] sm:$0xff]
        %v1222 = vld [vmem:[%s5 + $0x30] sm:$0xff]
        %v1223 = vld [vmem:[%s5 + $0x38] sm:$0xff]
        %v1224 = vld [vmem:[%s5 + $0x40] sm:$0xff]
        %v1225 = vld [vmem:[%s5 + $0x48] sm:$0xff]
        %v1226 = vld [vmem:[%s5 + $0x50] sm:$0xff]
        %v1227 = vld [vmem:[%s5 + $0x58] sm:$0xff]
        %v1228 = vld [vmem:[%s5 + $0x60] sm:$0xff]
        %v1229 = vld [vmem:[%s5 + $0x68] sm:$0xff]
        %v1230 = vld [vmem:[%s5 + $0x70] sm:$0xff]
        %v1231 = vld [vmem:[%s5 + $0x78] sm:$0xff]
        %v1232 = vld [vmem:[%s6] sm:$0x1]
        %v1234 = vlaneseq
        %v1235 = vshrl.u32 %v1234, 7
        %v1236 = vsub.s32 0, %v1235
        %v1237 = vrot.slane %v1232, %v1236
        %1239 = vmatprep.subr.mxu0 0.0
        %1240 = vmatpush1.msra.mxu0 %v1216
        %1241 = vmatprep.subr.mxu0 0.0
        %1242 = vmatpush1.msra.mxu0 %v1217
        %1243 = vmatprep.subr.mxu0 0.0
        %1244 = vmatpush1.msra.mxu0 %v1218
        %1245 = vmatprep.subr.mxu0 0.0
        %1246 = vmatpush1.msra.mxu0 %v1219
        %1247 = vmatprep.subr.mxu0 0.0
        %1248 = vmatpush1.msra.mxu0 %v1220
        %1249 = vmatprep.subr.mxu0 0.0
        %1250 = vmatpush1.msra.mxu0 %v1221
        %1251 = vmatprep.subr.mxu0 0.0
        %1252 = vmatpush1.msra.mxu0 %v1222
        %1253 = vmatprep.subr.mxu0 0.0
        %1254 = vmatpush1.msra.mxu0 %v1223
        %1255 = vmatprep.subr.mxu0 0.0
        %1256 = vmatpush1.msra.mxu0 %v1224
        %1257 = vmatprep.subr.mxu0 0.0
        %1258 = vmatpush1.msra.mxu0 %v1225
        %1259 = vmatprep.subr.mxu0 0.0
        %1260 = vmatpush1.msra.mxu0 %v1226
        %1261 = vmatprep.subr.mxu0 0.0
        %1262 = vmatpush1.msra.mxu0 %v1227
        %1263 = vmatprep.subr.mxu0 0.0
        %1264 = vmatpush1.msra.mxu0 %v1228
        %1265 = vmatprep.subr.mxu0 0.0
        %1266 = vmatpush1.msra.mxu0 %v1229
        %1267 = vmatprep.subr.mxu0 0.0
        %1268 = vmatpush1.msra.mxu0 %v1230
        %1269 = vmatprep.subr.mxu0 0.0
        %1270 = vmatpush1.msra.mxu0 %v1231
        %1271 = vmatprep.subr.mxu0 0.0
        %1272 = vmatpush1.msra.mxu0 0.0
        %1273 = vmatprep.subr.mxu0 0.0
        %1274 = vmatpush1.msra.mxu0 0.0
        %1275 = vmatprep.subr.mxu0 0.0
        %1276 = vmatpush1.msra.mxu0 0.0
        %1277 = vmatprep.subr.mxu0 0.0
        %1278 = vmatpush1.msra.mxu0 0.0
        %1279 = vmatprep.subr.mxu0 0.0
        %1280 = vmatpush1.msra.mxu0 0.0
        %1281 = vmatprep.subr.mxu0 0.0
        %1282 = vmatpush1.msra.mxu0 0.0
        %1283 = vmatprep.subr.mxu0 0.0
        %1284 = vmatpush1.msra.mxu0 0.0
        %1285 = vmatprep.subr.mxu0 0.0
        %1286 = vmatpush1.msra.mxu0 0.0
        %1287 = vmatprep.subr.mxu0 0.0
        %1288 = vmatpush1.msra.mxu0 0.0
        %1289 = vmatprep.subr.mxu0 0.0
        %1290 = vmatpush1.msra.mxu0 0.0
        %1291 = vmatprep.subr.mxu0 0.0
        %1292 = vmatpush1.msra.mxu0 0.0
        %1293 = vmatprep.subr.mxu0 0.0
        %1294 = vmatpush1.msra.mxu0 0.0
        %1295 = vmatprep.subr.mxu0 0.0
        %1296 = vmatpush1.msra.mxu0 0.0
        %1297 = vmatprep.subr.mxu0 0.0
        %1298 = vmatpush1.msra.mxu0 0.0
        %1299 = vmatprep.subr.mxu0 0.0
        %1300 = vmatpush1.msra.mxu0 0.0
        %1301 = vmatprep.subr.mxu0 0.0
        %1302 = vmatpush1.msra.mxu0 0.0
        %1303 = vmatprep.mubr.f32.mxu0 0.0
        %1304 = vmatmul.mubr.f32.gmra.mrb[0].mxu0 %v1213
        %v1305 = vpop.f32.mrb[0].mxu0
        %v1306 = vadd.f32 %v1237, %v1305
        %v1307 = vpop.f32.mrb[0].mxu0
        %1308 = vdwg.mxu0
        %1309 = vst [vmem:[%s272] sm:$0xff] %v1306
        %s1310 = sand.u32 %s181, 1
        %s1311 = scalar_lea.sflag [#allocation3], %s1310
        %s1312 = sand.u32 %s181, 1
        %s1313 = smul.addr %s1312, 8
        %s1314 = scalar_lea.vmem [#allocation2], %s1313
        // Predicated region
        $region49: #{tpu_custom_call.1} parent=47 // pred_check
          %p1315 = pneg %p191
        $region50: #{tpu_custom_call.1} parent=47 // pred_check_branch
          %1317 = sbr.rel (%p1315) target = $region52
        $region51: #{tpu_custom_call.1} parent=47 // pred_region
          %s1319 = ssub.s32 128, 128
          %1320 = vsyncadd %s1311, %s1319
          %s1321 = smul.addr %s21, 128
          %s1322 = scalar_lea.hbm %s7, %s1321
          %s1324 = sshll.u32 %s1314, 4
          %s1325 = int_to_ptr.vmem [resolvable:$true] %s1324
          %1327 = dma.vmem_to_hbm [thread:$0]  %s1325, 128, %s1322, %s1311
        $region52: #{tpu_custom_call.1} parent=47 // pred_fallthru
          _
      $region48: #{tpu_custom_call.1} parent=5 // pred_fallthru
        _
      %p1328 = scmp.le.s32.totalorder 2, %s16
      // Predicated region
      $region53: #{tpu_custom_call.1} parent=5 // pred_check
        %p1329 = pneg %p1328
      $region54: #{tpu_custom_call.1} parent=5 // pred_check_branch
        %1331 = sbr.rel (%p1329) target = $region56
      $region55: #{tpu_custom_call.1} parent=5 // pred_region
        %s1332 = ssub.s32 %s16, 2
        // Predicated region
        $region57: #{tpu_custom_call.1} parent=55 // pred_check
          %p1333 = pneg %p197
        $region58: #{tpu_custom_call.1} parent=55 // pred_check_branch
          %1335 = sbr.rel (%p1333) target = $region60
        $region59: #{tpu_custom_call.1} parent=55 // pred_region
          %s1336 = sand.u32 %s182, 1
          %s1337 = scalar_lea.sflag [#allocation3], %s1336
          %s1338 = sand.u32 %s182, 1
          %s1339 = smul.addr %s1338, 8
          %s1340 = scalar_lea.vmem [#allocation2], %s1339
          %1341 = dma.done %s1337, 128
        $region60: #{tpu_custom_call.1} parent=55 // pred_fallthru
          _
      $region56: #{tpu_custom_call.1} parent=5 // pred_fallthru
        _
    $region6: #{tpu_custom_call.1} parent=1 // loop_footer
      %s20 = sadd.s32 1, %s16
    $region7: #{tpu_custom_call.1} parent=1 // loop_footer_branch
      %15 = sbr.rel target = $region3
    $region8: #{tpu_custom_call.1} parent=1 // loop_exit
      _
    %1342 = vsyncpa [#allocation3], 1
    %s1343 = scalar_lea.sflag [#allocation3], 1
    %1344 = vsyncpa %s1343, 1

</llo_original>
